<compile_context>
chip_gen: v5e
topology: v5e:2x2
jax: 0.10.0
libtpu: 0.0.40
codegen_flags: <defaults>
</compile_context>

<pallas_src>
import functools

import jax
import jax.numpy as jnp
from jax.experimental import pallas as pl
from jax.experimental.pallas import tpu as pltpu

SUBLANE = 8
H1, H2, H3 = 64, 128, 64


def _round_up(x, m):
    return (x + m - 1) // m * m


def _cdiv(a, b):
    return (a + b - 1) // b


def _mlp_kernel(x_ref, w1_ref, b1_ref, w2_ref, b2_ref, w3_ref, b3_ref,
                w4_ref, o_ref):
    """Fused 4-layer MLP: (Linear+ReLU) x3, then bias-free Linear(H3 -> 1).

    x_ref : (tb, F)   batch in sublanes, tiny F in lanes (no padding)
    b*_ref: (1, H)    bias rows (sublane-broadcast inside the kernel)
    w4_ref: (1, H3)   final weight row
    o_ref : (tb, 1)
    """
    x = x_ref[...]
    f = x.shape[1]

    # Layer 1 (F -> 64).  F is tiny for tabular inputs, so an unrolled VPU
    # multiply-accumulate avoids a degenerate K=F MXU matmul; for wide inputs
    # fall back to the MXU.
    if f <= 16:
        w1 = w1_ref[...]
        h = x[:, 0:1] * w1[0:1, :]
        for k in range(1, f):
            h = h + x[:, k:k + 1] * w1[k:k + 1, :]
    else:
        h = jnp.dot(x, w1_ref[...], preferred_element_type=jnp.float32)
    h = jnp.maximum(h + b1_ref[...], 0.0)

    # Layer 2 (64 -> 128) and layer 3 (128 -> 64): MXU matmuls.
    h = jnp.dot(h, w2_ref[...], preferred_element_type=jnp.float32)
    h = jnp.maximum(h + b2_ref[...], 0.0)
    h = jnp.dot(h, w3_ref[...], preferred_element_type=jnp.float32)
    h = jnp.maximum(h + b3_ref[...], 0.0)

    # Layer 4 (64 -> 1, no bias): VPU multiply + lane reduction (XLU slot is
    # otherwise idle) instead of an N=1 MXU matmul; yields the compact scalar
    # column directly.
    o_ref[...] = jnp.sum(h * w4_ref[...], axis=-1,
                         keepdims=True).astype(o_ref.dtype)


@functools.partial(jax.jit, static_argnames=("block_b",))
def complex_shift_forward(x, params, *, block_b=2048):
    """x: (B, F) float32 -> (B, 1) float32."""
    w1, b1, w2, b2, w3, b3, w4 = params
    B, F = x.shape

    # Batch tiling.  No host-side padding: the last (partial) block is handled
    # by Pallas boundary masking (rows are independent; OOB rows are dropped).
    if B <= block_b:
        tb = B                                    # single full-extent block
    else:
        n_tiles = _cdiv(B, block_b)
        if n_tiles % 2 == 1:                      # even split for v7x's 2 TCs
            n_tiles += 1
        tb = _round_up(_cdiv(B, n_tiles), SUBLANE)
    n_tiles = _cdiv(B, tb)

    flops = 2 * B * (F * H1 + H1 * H2 + H2 * H3 + H3)
    bytes_accessed = 4 * (B * F + B +
                          F * H1 + H1 + H1 * H2 + H2 + H2 * H3 + H3 + H3)

    const = lambda i: (0, 0)
    out = pl.pallas_call(
        _mlp_kernel,
        out_shape=jax.ShapeDtypeStruct((B, 1), jnp.float32),
        grid_spec=pl.GridSpec(
            grid=(n_tiles,),
            in_specs=[
                pl.BlockSpec((tb, F), lambda i: (i, 0)),   # x tile
                pl.BlockSpec(w1.shape, const),             # weights/biases:
                pl.BlockSpec(b1.shape, const),             # constant index_map
                pl.BlockSpec(w2.shape, const),             # -> fetched once,
                pl.BlockSpec(b2.shape, const),             #    VMEM-resident
                pl.BlockSpec(w3.shape, const),
                pl.BlockSpec(b3.shape, const),
                pl.BlockSpec(w4.shape, const),
            ],
            out_specs=pl.BlockSpec((tb, 1), lambda i: (i, 0)),
        ),
        compiler_params=pltpu.CompilerParams(
            dimension_semantics=("parallel",),
        ),
        cost_estimate=pl.CostEstimate(flops=flops, transcendentals=0,
                                      bytes_accessed=bytes_accessed),
    )(x, w1, b1, w2, b2, w3, b3, w4)
    return out


class ComplexShiftDefaultTabularJax:
    """JAX/Pallas equivalent of the PyTorch ComplexShiftDefaultTabular module."""

    def __init__(self, key, n_features=1):
        self.n_features = n_features
        ks = jax.random.split(key, 8)

        def _uniform(k, shape, fan_in):
            bound = 1.0 / (fan_in ** 0.5)
            return jax.random.uniform(k, shape, jnp.float32, -bound, bound)

        # Natural (PyTorch-equivalent) parameters.
        self.w1 = _uniform(ks[0], (n_features, H1), n_features)
        self.b1 = _uniform(ks[1], (H1,), n_features)
        self.w2 = _uniform(ks[2], (H1, H2), H1)
        self.b2 = _uniform(ks[3], (H2,), H1)
        self.w3 = _uniform(ks[4], (H2, H3), H2)
        self.b3 = _uniform(ks[5], (H3,), H2)
        self.w4 = _uniform(ks[6], (H3, 1), H3)            # fc4, bias=False

        # Kernel parameter layout: biases as (1, H) rows; final weight as a
        # (1, H3) row for the VPU multiply + lane reduction.  No lane padding.
        self.kernel_params = (
            self.w1, self.b1.reshape(1, H1),
            self.w2, self.b2.reshape(1, H2),
            self.w3, self.b3.reshape(1, H3),
            self.w4.T,
        )

    def __call__(self, x, block_b=2048):
        return complex_shift_forward(x, self.kernel_params, block_b=block_b)

    def reference(self, x):
        h = jnp.maximum(x @ self.w1 + self.b1, 0.0)
        h = jnp.maximum(h @ self.w2 + self.b2, 0.0)
        h = jnp.maximum(h @ self.w3 + self.b3, 0.0)
        return h @ self.w4


if __name__ == "__main__":
    key = jax.random.PRNGKey(0)
    k_model, k_x, k_big = jax.random.split(key, 3)

    batch, n_features = 8, 4
    model = ComplexShiftDefaultTabularJax(k_model, n_features=n_features)

    # Small batch: single-block path.
    x = jax.random.normal(k_x, (batch, n_features), jnp.float32)
    out = model(x)
    jax.block_until_ready(out)
    assert out.shape == (batch, 1)
    ref = model.reference(x)
    assert jnp.allclose(out, ref, atol=1e-4, rtol=1e-4), (
        f"max abs err {float(jnp.max(jnp.abs(out - ref)))}"
    )

    # Larger batch: multi-tile "parallel" grid path (even tile count, partial
    # last block, no host-side pad/slice).
    big = 2500
    x_big = jax.random.normal(k_big, (big, n_features), jnp.float32)
    out_big = model(x_big)
    jax.block_until_ready(out_big)
    assert out_big.shape == (big, 1)
    ref_big = model.reference(x_big)
    assert jnp.allclose(out_big, ref_big, atol=1e-4, rtol=1e-4), (
        f"max abs err {float(jnp.max(jnp.abs(out_big - ref_big)))}"
    )

    print("KERNEL_OK")
</pallas_src>

<mosaic_0001>
module attributes {stable_mosaic.version = 11 : i64} {
  func.func @_mlp_kernel(%arg0: i32, %arg1: memref<8x4xf32, #tpu.memory_space<vmem>>, %arg2: memref<4x64xf32, #tpu.memory_space<vmem>>, %arg3: memref<1x64xf32, #tpu.memory_space<vmem>>, %arg4: memref<64x128xf32, #tpu.memory_space<vmem>>, %arg5: memref<1x128xf32, #tpu.memory_space<vmem>>, %arg6: memref<128x64xf32, #tpu.memory_space<vmem>>, %arg7: memref<1x64xf32, #tpu.memory_space<vmem>>, %arg8: memref<1x64xf32, #tpu.memory_space<vmem>>, %arg9: memref<8x1xf32, #tpu.memory_space<vmem>>) attributes {dimension_semantics = [#tpu.dimension_semantics<parallel>], iteration_bounds = array<i64: 1>, scalar_prefetch = 0 : i64, scratch_operands = 0 : i64, tpu.core_type = #tpu.core_type<tc>, window_params = [{transform_indices = @transform_0, window_bounds = array<i64: 8, 4>}, {pipeline_mode = #tpu.pipeline_mode<synchronous>, transform_indices = @transform_1, window_bounds = array<i64: 4, 64>}, {pipeline_mode = #tpu.pipeline_mode<synchronous>, transform_indices = @transform_2, window_bounds = array<i64: 1, 64>}, {pipeline_mode = #tpu.pipeline_mode<synchronous>, transform_indices = @transform_3, window_bounds = array<i64: 64, 128>}, {pipeline_mode = #tpu.pipeline_mode<synchronous>, transform_indices = @transform_4, window_bounds = array<i64: 1, 128>}, {pipeline_mode = #tpu.pipeline_mode<synchronous>, transform_indices = @transform_5, window_bounds = array<i64: 128, 64>}, {pipeline_mode = #tpu.pipeline_mode<synchronous>, transform_indices = @transform_6, window_bounds = array<i64: 1, 64>}, {pipeline_mode = #tpu.pipeline_mode<synchronous>, transform_indices = @transform_7, window_bounds = array<i64: 1, 64>}, {transform_indices = @transform_8, window_bounds = array<i64: 8, 1>}]} {
    %c0 = arith.constant 0 : index
    %c0_0 = arith.constant 0 : index
    %0 = vector.load %arg1[%c0, %c0_0] : memref<8x4xf32, #tpu.memory_space<vmem>>, vector<8x4xf32>
    %c0_1 = arith.constant 0 : index
    %c0_2 = arith.constant 0 : index
    %1 = vector.load %arg2[%c0_1, %c0_2] : memref<4x64xf32, #tpu.memory_space<vmem>>, vector<4x64xf32>
    %2 = vector.extract_strided_slice %0 {offsets = [0, 0], sizes = [8, 1], strides = [1, 1]} : vector<8x4xf32> to vector<8x1xf32>
    %3 = vector.extract_strided_slice %1 {offsets = [0, 0], sizes = [1, 64], strides = [1, 1]} : vector<4x64xf32> to vector<1x64xf32>
    %4 = vector.broadcast %2 : vector<8x1xf32> to vector<8x64xf32>
    %5 = vector.broadcast %3 : vector<1x64xf32> to vector<8x64xf32>
    %6 = arith.mulf %4, %5 : vector<8x64xf32>
    %7 = vector.extract_strided_slice %0 {offsets = [0, 1], sizes = [8, 1], strides = [1, 1]} : vector<8x4xf32> to vector<8x1xf32>
    %8 = vector.extract_strided_slice %1 {offsets = [1, 0], sizes = [1, 64], strides = [1, 1]} : vector<4x64xf32> to vector<1x64xf32>
    %9 = vector.broadcast %7 : vector<8x1xf32> to vector<8x64xf32>
    %10 = vector.broadcast %8 : vector<1x64xf32> to vector<8x64xf32>
    %11 = arith.mulf %9, %10 : vector<8x64xf32>
    %12 = arith.addf %6, %11 : vector<8x64xf32>
    %13 = vector.extract_strided_slice %0 {offsets = [0, 2], sizes = [8, 1], strides = [1, 1]} : vector<8x4xf32> to vector<8x1xf32>
    %14 = vector.extract_strided_slice %1 {offsets = [2, 0], sizes = [1, 64], strides = [1, 1]} : vector<4x64xf32> to vector<1x64xf32>
    %15 = vector.broadcast %13 : vector<8x1xf32> to vector<8x64xf32>
    %16 = vector.broadcast %14 : vector<1x64xf32> to vector<8x64xf32>
    %17 = arith.mulf %15, %16 : vector<8x64xf32>
    %18 = arith.addf %12, %17 : vector<8x64xf32>
    %19 = vector.extract_strided_slice %0 {offsets = [0, 3], sizes = [8, 1], strides = [1, 1]} : vector<8x4xf32> to vector<8x1xf32>
    %20 = vector.extract_strided_slice %1 {offsets = [3, 0], sizes = [1, 64], strides = [1, 1]} : vector<4x64xf32> to vector<1x64xf32>
    %21 = vector.broadcast %19 : vector<8x1xf32> to vector<8x64xf32>
    %22 = vector.broadcast %20 : vector<1x64xf32> to vector<8x64xf32>
    %23 = arith.mulf %21, %22 : vector<8x64xf32>
    %24 = arith.addf %18, %23 : vector<8x64xf32>
    %c0_3 = arith.constant 0 : index
    %c0_4 = arith.constant 0 : index
    %25 = vector.load %arg3[%c0_3, %c0_4] : memref<1x64xf32, #tpu.memory_space<vmem>>, vector<1x64xf32>
    %26 = vector.broadcast %25 : vector<1x64xf32> to vector<8x64xf32>
    %27 = arith.addf %24, %26 : vector<8x64xf32>
    %cst = arith.constant 0.000000e+00 : f32
    %28 = vector.broadcast %cst : f32 to vector<8x64xf32>
    %29 = arith.maximumf %27, %28 : vector<8x64xf32>
    %c0_5 = arith.constant 0 : index
    %c0_6 = arith.constant 0 : index
    %30 = vector.load %arg4[%c0_5, %c0_6] : memref<64x128xf32, #tpu.memory_space<vmem>>, vector<64x128xf32>
    %cst_7 = arith.constant dense<0.000000e+00> : vector<8x128xf32>
    %31 = tpu.matmul %29, %30, %cst_7 {dimension_numbers = #tpu.dot_dimension_numbers<[1], [0], [0], [1], [0, 0, 1, 1], [], []>} : vector<8x64xf32>, vector<64x128xf32>, vector<8x128xf32> -> vector<8x128xf32>
    %c0_8 = arith.constant 0 : index
    %c0_9 = arith.constant 0 : index
    %32 = vector.load %arg5[%c0_8, %c0_9] : memref<1x128xf32, #tpu.memory_space<vmem>>, vector<1x128xf32>
    %33 = vector.broadcast %32 : vector<1x128xf32> to vector<8x128xf32>
    %34 = arith.addf %31, %33 : vector<8x128xf32>
    %cst_10 = arith.constant 0.000000e+00 : f32
    %35 = vector.broadcast %cst_10 : f32 to vector<8x128xf32>
    %36 = arith.maximumf %34, %35 : vector<8x128xf32>
    %c0_11 = arith.constant 0 : index
    %c0_12 = arith.constant 0 : index
    %37 = vector.load %arg6[%c0_11, %c0_12] : memref<128x64xf32, #tpu.memory_space<vmem>>, vector<128x64xf32>
    %cst_13 = arith.constant dense<0.000000e+00> : vector<8x64xf32>
    %38 = tpu.matmul %36, %37, %cst_13 {dimension_numbers = #tpu.dot_dimension_numbers<[1], [0], [0], [1], [0, 0, 1, 1], [], []>} : vector<8x128xf32>, vector<128x64xf32>, vector<8x64xf32> -> vector<8x64xf32>
    %c0_14 = arith.constant 0 : index
    %c0_15 = arith.constant 0 : index
    %39 = vector.load %arg7[%c0_14, %c0_15] : memref<1x64xf32, #tpu.memory_space<vmem>>, vector<1x64xf32>
    %40 = vector.broadcast %39 : vector<1x64xf32> to vector<8x64xf32>
    %41 = arith.addf %38, %40 : vector<8x64xf32>
    %cst_16 = arith.constant 0.000000e+00 : f32
    %42 = vector.broadcast %cst_16 : f32 to vector<8x64xf32>
    %43 = arith.maximumf %41, %42 : vector<8x64xf32>
    %c0_17 = arith.constant 0 : index
    %c0_18 = arith.constant 0 : index
    %44 = vector.load %arg8[%c0_17, %c0_18] : memref<1x64xf32, #tpu.memory_space<vmem>>, vector<1x64xf32>
    %45 = vector.broadcast %44 : vector<1x64xf32> to vector<8x64xf32>
    %46 = arith.mulf %43, %45 : vector<8x64xf32>
    %cst_19 = arith.constant dense<0.000000e+00> : vector<8xf32>
    %47 = vector.multi_reduction <add>, %46, %cst_19 [1] : vector<8x64xf32> to vector<8xf32>
    %48 = vector.shape_cast %47 : vector<8xf32> to vector<8x1xf32>
    %c0_20 = arith.constant 0 : index
    %c0_21 = arith.constant 0 : index
    %49 = vector.load %arg9[%c0_20, %c0_21] : memref<8x1xf32, #tpu.memory_space<vmem>>, vector<8x1xf32>
    tpu.vector_store %arg9[%c0_20, %c0_21], %48 {strides = array<i32>} : memref<8x1xf32, #tpu.memory_space<vmem>>, vector<8x1xf32>,
    return
  }
  func.func @transform_0(%arg0: i32) -> (i32, i32) {
    %c0_i32 = arith.constant 0 : i32
    %c0_i32_0 = arith.constant 0 : i32
    return %arg0, %c0_i32 : i32, i32
  }
  func.func @transform_1(%arg0: i32) -> (i32, i32) {
    %c0_i32 = arith.constant 0 : i32
    %c0_i32_0 = arith.constant 0 : i32
    %c0_i32_1 = arith.constant 0 : i32
    return %c0_i32, %c0_i32_0 : i32, i32
  }
  func.func @transform_2(%arg0: i32) -> (i32, i32) {
    %c0_i32 = arith.constant 0 : i32
    %c0_i32_0 = arith.constant 0 : i32
    %c0_i32_1 = arith.constant 0 : i32
    return %c0_i32, %c0_i32_0 : i32, i32
  }
  func.func @transform_3(%arg0: i32) -> (i32, i32) {
    %c0_i32 = arith.constant 0 : i32
    %c0_i32_0 = arith.constant 0 : i32
    %c0_i32_1 = arith.constant 0 : i32
    return %c0_i32, %c0_i32_0 : i32, i32
  }
  func.func @transform_4(%arg0: i32) -> (i32, i32) {
    %c0_i32 = arith.constant 0 : i32
    %c0_i32_0 = arith.constant 0 : i32
    %c0_i32_1 = arith.constant 0 : i32
    return %c0_i32, %c0_i32_0 : i32, i32
  }
  func.func @transform_5(%arg0: i32) -> (i32, i32) {
    %c0_i32 = arith.constant 0 : i32
    %c0_i32_0 = arith.constant 0 : i32
    %c0_i32_1 = arith.constant 0 : i32
    return %c0_i32, %c0_i32_0 : i32, i32
  }
  func.func @transform_6(%arg0: i32) -> (i32, i32) {
    %c0_i32 = arith.constant 0 : i32
    %c0_i32_0 = arith.constant 0 : i32
    %c0_i32_1 = arith.constant 0 : i32
    return %c0_i32, %c0_i32_0 : i32, i32
  }
  func.func @transform_7(%arg0: i32) -> (i32, i32) {
    %c0_i32 = arith.constant 0 : i32
    %c0_i32_0 = arith.constant 0 : i32
    %c0_i32_1 = arith.constant 0 : i32
    return %c0_i32, %c0_i32_0 : i32, i32
  }
  func.func @transform_8(%arg0: i32) -> (i32, i32) {
    %c0_i32 = arith.constant 0 : i32
    %c0_i32_0 = arith.constant 0 : i32
    return %arg0, %c0_i32 : i32, i32
  }
}

</mosaic_0001>

<llo_original>
// kernel: complex_shift_forward.1
$region0: #{complex_shift_forward.1}
  #allocation0 [shape = 'u32[]', space=smem, size = 0x4, offset = 0x4, fixed_abs, tag = 'smem constant byte address 0x4 - core index']
  #allocation1 [shape = 'u32[72,128]{1,0:T(1,128)}', space=vmem, size = 0x9000, scoped, tag = 'internal scratch']
  %s0 = inlined_call_operand.vmem [shape: f32[8,4], index: 0, kind: input, shape index: {}]
  %s1 = inlined_call_operand.vmem [shape: f32[4,64], index: 1, kind: input, shape index: {}]
  %s2 = inlined_call_operand.vmem [shape: f32[1,64], index: 2, kind: input, shape index: {}]
  %s3 = inlined_call_operand.vmem [shape: f32[64,128], index: 3, kind: input, shape index: {}]
  %s4 = inlined_call_operand.vmem [shape: f32[1,128], index: 4, kind: input, shape index: {}]
  %s5 = inlined_call_operand.vmem [shape: f32[128,64], index: 5, kind: input, shape index: {}]
  %s6 = inlined_call_operand.vmem [shape: f32[1,64], index: 6, kind: input, shape index: {}]
  %s7 = inlined_call_operand.vmem [shape: f32[1,64], index: 7, kind: input, shape index: {}]
  %s8 = inlined_call_operand.vmem [shape: f32[8,1], index: 8, kind: output, shape index: {}]
  %s9 = sld [smem:[#allocation0]]
  $region42: #{complex_shift_forward.1} parent=0
    _
  %s11 = ssub.s32 1, %s9
  %s12 = scalar_select 0, %s11, %s9
  // Predicated region
  $region2: #{complex_shift_forward.1} parent=0 // pred_check
    _
  $region3: #{complex_shift_forward.1} parent=0 // pred_check_branch
    %14 = sbr.rel (0) target = $region5
  $region4: #{complex_shift_forward.1} parent=0 // pred_region
    _
  $region5: #{complex_shift_forward.1} parent=0 // pred_fallthru
    _
  // Predicated region
  $region6: #{complex_shift_forward.1} parent=0 // pred_check
    _
  $region7: #{complex_shift_forward.1} parent=0 // pred_check_branch
    %16 = sbr.rel (0) target = $region9
  $region8: #{complex_shift_forward.1} parent=0 // pred_region
    _
  $region9: #{complex_shift_forward.1} parent=0 // pred_fallthru
    _
  // Predicated region
  $region10: #{complex_shift_forward.1} parent=0 // pred_check
    _
  $region11: #{complex_shift_forward.1} parent=0 // pred_check_branch
    %18 = sbr.rel (0) target = $region13
  $region12: #{complex_shift_forward.1} parent=0 // pred_region
    _
  $region13: #{complex_shift_forward.1} parent=0 // pred_fallthru
    _
  // Predicated region
  $region14: #{complex_shift_forward.1} parent=0 // pred_check
    _
  $region15: #{complex_shift_forward.1} parent=0 // pred_check_branch
    %20 = sbr.rel (0) target = $region17
  $region16: #{complex_shift_forward.1} parent=0 // pred_region
    _
  $region17: #{complex_shift_forward.1} parent=0 // pred_fallthru
    _
  // Predicated region
  $region18: #{complex_shift_forward.1} parent=0 // pred_check
    _
  $region19: #{complex_shift_forward.1} parent=0 // pred_check_branch
    %22 = sbr.rel (0) target = $region21
  $region20: #{complex_shift_forward.1} parent=0 // pred_region
    _
  $region21: #{complex_shift_forward.1} parent=0 // pred_fallthru
    _
  // Predicated region
  $region22: #{complex_shift_forward.1} parent=0 // pred_check
    _
  $region23: #{complex_shift_forward.1} parent=0 // pred_check_branch
    %24 = sbr.rel (0) target = $region25
  $region24: #{complex_shift_forward.1} parent=0 // pred_region
    _
  $region25: #{complex_shift_forward.1} parent=0 // pred_fallthru
    _
  // Predicated region
  $region26: #{complex_shift_forward.1} parent=0 // pred_check
    _
  $region27: #{complex_shift_forward.1} parent=0 // pred_check_branch
    %26 = sbr.rel (0) target = $region29
  $region28: #{complex_shift_forward.1} parent=0 // pred_region
    _
  $region29: #{complex_shift_forward.1} parent=0 // pred_fallthru
    _
  // Predicated region
  $region30: #{complex_shift_forward.1} parent=0 // pred_check
    _
  $region31: #{complex_shift_forward.1} parent=0 // pred_check_branch
    %28 = sbr.rel (0) target = $region33
  $region32: #{complex_shift_forward.1} parent=0 // pred_region
    _
  $region33: #{complex_shift_forward.1} parent=0 // pred_fallthru
    _
  %v29 = vld [vmem:[%s0] sm:$0xff]
  %v30 = vld [vmem:[%s1] sm:$0xf]
  %32 = vset.pattern.permute.xlu0 0
  %33 = vperm.xlu0 %32, %v29
  %v34 = vpop.permute.xlu0 %33
  %v36 = vperm.slane %v30, 0
  %v37 = vmul.f32 %v34, %v36
  %38 = vset.pattern.permute.xlu0 1
  %39 = vperm.xlu0 %38, %v29
  %v40 = vpop.permute.xlu0 %39
  %v42 = vperm.slane %v30, 1
  %v43 = vmul.f32 %v40, %v42
  %v44 = vadd.f32 %v37, %v43
  %45 = vset.pattern.permute.xlu0 2
  %46 = vperm.xlu0 %45, %v29
  %v47 = vpop.permute.xlu0 %46
  %v49 = vperm.slane %v30, 2
  %v50 = vmul.f32 %v47, %v49
  %v51 = vadd.f32 %v44, %v50
  %52 = vset.pattern.permute.xlu0 3
  %53 = vperm.xlu0 %52, %v29
  %v54 = vpop.permute.xlu0 %53
  %v56 = vperm.slane %v30, 3
  %v57 = vmul.f32 %v54, %v56
  %v58 = vadd.f32 %v51, %v57
  %v59 = vld [vmem:[%s2] sm:$0x1]
  %v61 = vperm.slane %v59, 0
  %v63 = vadd.f32 %v58, %v61
  %v64 = vmax.f32 %v63, 0.0
  %v65 = vld [vmem:[%s3] sm:$0xff]
  %v66 = vld [vmem:[%s3 + $0x8] sm:$0xff]
  %v67 = vld [vmem:[%s3 + $0x10] sm:$0xff]
  %v68 = vld [vmem:[%s3 + $0x18] sm:$0xff]
  %v69 = vld [vmem:[%s3 + $0x20] sm:$0xff]
  %v70 = vld [vmem:[%s3 + $0x28] sm:$0xff]
  %v71 = vld [vmem:[%s3 + $0x30] sm:$0xff]
  %v72 = vld [vmem:[%s3 + $0x38] sm:$0xff]
  %v73 = vld [vmem:[%s4] sm:$0x1]
  %v75 = vperm.slane %v73, 0
  %vm77 = vcmask 523264
  %v79 = vsel %vm77, %v64, 0
  %81 = vmatpush.msra.mxu0 0.0
  %82 = vmatpush.msra.mxu0 0.0
  %83 = vmatpush.msra.mxu0 0.0
  %84 = vmatpush.msra.mxu0 0.0
  %85 = vmatpush.msra.mxu0 0.0
  %86 = vmatpush.msra.mxu0 0.0
  %87 = vmatpush.msra.mxu0 0.0
  %88 = vmatpush.msra.mxu0 0.0
  %89 = vmatpush.msra.mxu0 %v72
  %90 = vmatpush.msra.mxu0 %v71
  %91 = vmatpush.msra.mxu0 %v70
  %92 = vmatpush.msra.mxu0 %v69
  %93 = vmatpush.msra.mxu0 %v68
  %94 = vmatpush.msra.mxu0 %v67
  %95 = vmatpush.msra.mxu0 %v66
  %96 = vmatpush.msra.mxu0 %v65
  %97 = vmatmul.f32.gmra.mxu0 %v79
  %v98 = vpop.f32.mrf.mxu0
  %v99 = vadd.f32 %v75, %v98
  %100 = vdwg.mxu0
  %v101 = vmax.f32 %v99, 0.0
  %v102 = vld [vmem:[%s5] sm:$0xff]
  %v103 = vld [vmem:[%s5 + $0x8] sm:$0xff]
  %v104 = vld [vmem:[%s5 + $0x10] sm:$0xff]
  %v105 = vld [vmem:[%s5 + $0x18] sm:$0xff]
  %v106 = vld [vmem:[%s5 + $0x20] sm:$0xff]
  %v107 = vld [vmem:[%s5 + $0x28] sm:$0xff]
  %v108 = vld [vmem:[%s5 + $0x30] sm:$0xff]
  %v109 = vld [vmem:[%s5 + $0x38] sm:$0xff]
  %v110 = vld [vmem:[%s5 + $0x40] sm:$0xff]
  %v111 = vld [vmem:[%s5 + $0x48] sm:$0xff]
  %v112 = vld [vmem:[%s5 + $0x50] sm:$0xff]
  %v113 = vld [vmem:[%s5 + $0x58] sm:$0xff]
  %v114 = vld [vmem:[%s5 + $0x60] sm:$0xff]
  %v115 = vld [vmem:[%s5 + $0x68] sm:$0xff]
  %v116 = vld [vmem:[%s5 + $0x70] sm:$0xff]
  %v117 = vld [vmem:[%s5 + $0x78] sm:$0xff]
  %v118 = vld [vmem:[%s6] sm:$0x1]
  %v120 = vperm.slane %v118, 0
  %122 = vmatpush.msra.mxu0 %v117
  %123 = vmatpush.msra.mxu0 %v116
  %124 = vmatpush.msra.mxu0 %v115
  %125 = vmatpush.msra.mxu0 %v114
  %126 = vmatpush.msra.mxu0 %v113
  %127 = vmatpush.msra.mxu0 %v112
  %128 = vmatpush.msra.mxu0 %v111
  %129 = vmatpush.msra.mxu0 %v110
  %130 = vmatpush.msra.mxu0 %v109
  %131 = vmatpush.msra.mxu0 %v108
  %132 = vmatpush.msra.mxu0 %v107
  %133 = vmatpush.msra.mxu0 %v106
  %134 = vmatpush.msra.mxu0 %v105
  %135 = vmatpush.msra.mxu0 %v104
  %136 = vmatpush.msra.mxu0 %v103
  %137 = vmatpush.msra.mxu0 %v102
  %138 = vmatmul.f32.gmra.mxu0 %v101
  %v139 = vpop.f32.mrf.mxu0
  %v140 = vadd.f32 %v120, %v139
  %141 = vdwg.mxu0
  %v142 = vmax.f32 %v140, 0.0
  %v143 = vld [vmem:[%s7] sm:$0x1]
  %v145 = vperm.slane %v143, 0
  %v147 = vmul.f32 %v142, %v145
  %v148 = vsel %vm77, %v147, 0.0
  %149 = vadd.xlane.f32.xlu0 %v148
  %v150 = vpop.xlane.xlu0 %149
  %vm151 = vcmask 7168
  %152 = vst.msk [vmem:[%s8] sm:$0xff] %vm151, %v150
  // Predicated region
  $region34: #{complex_shift_forward.1} parent=0 // pred_check
    _
  $region35: #{complex_shift_forward.1} parent=0 // pred_check_branch
    %154 = sbr.rel (0) target = $region37
  $region36: #{complex_shift_forward.1} parent=0 // pred_region
    _
  $region37: #{complex_shift_forward.1} parent=0 // pred_fallthru
    _
  // Predicated region
  $region38: #{complex_shift_forward.1} parent=0 // pred_check
    _
  $region39: #{complex_shift_forward.1} parent=0 // pred_check_branch
    %156 = sbr.rel (0) target = $region41
  $region40: #{complex_shift_forward.1} parent=0 // pred_region
    _
  $region41: #{complex_shift_forward.1} parent=0 // pred_fallthru
    _

</llo_original>
